<compile_context>
chip_gen: v7x
topology: tpu7x:2x2x1
jax: 0.10.0
libtpu: 0.0.40
codegen_flags: <defaults>
</compile_context>

<pallas_src>
import jax
import jax.numpy as jnp
from jax.experimental import pallas as pl
from jax.experimental.pallas import tpu as pltpu


_NUM_CORES = 2                          # batch split across TensorCores (v7x)
_TARGET_TILE_BYTES = 2 * 1024 * 1024    # ~2 MiB per input tile -> large DMAs


def _round_up(x, m):
    return ((x + m - 1) // m) * m


def _make_kernel(B, bt, nb, needs_mask):
    """acc[(8, D)] += partial sums of (pred - targ)^2 * w over one (bt, D) tile."""

    def kernel(pred_ref, targ_ref, w_ref, acc_ref):
        i = pl.program_id(1)

        @pl.when(i == 0)
        def _():
            acc_ref[...] = jnp.zeros_like(acc_ref)

        p = pred_ref[...].astype(jnp.float32)
        t = targ_ref[...].astype(jnp.float32)
        diff = p - t
        wloss = diff * diff * w_ref[...].astype(jnp.float32)   # (bt, D) * (1, D)

        if needs_mask:
            # Zero out rows past the real batch (ragged tail / redundant grid
            # slots). A select (not a multiply), so OOB garbage never leaks.
            tile = pl.program_id(0) * nb + i
            rows = jax.lax.broadcasted_iota(jnp.int32, wloss.shape, 0) + tile * bt
            wloss = jnp.where(rows < B, wloss, 0.0)

        btile, d = wloss.shape
        # Fold the batch rows into the 8 sublanes with pure VALU adds (groups
        # of 8 rows align with (8, 128) tiles -> layout-free reshape). The
        # expensive cross-lane reduce is deferred to one tiny jnp.sum outside.
        acc_ref[...] += jnp.sum(wloss.reshape(btile // 8, 8, d), axis=0)

    return kernel


def weighted_loss(pred, targ, weights=None, *, tile_bytes=_TARGET_TILE_BYTES):
    """Pallas implementation of WeightedLoss.forward (L2 / MSE variant).

    pred, targ : [B, H, T]
    weights    : [H, T]  (or None for a plain mean)
    returns (scalar weighted mean loss, {})
    """
    B, H, T = pred.shape
    D = H * T

    if weights is None:
        weights = jnp.ones((H, T), dtype=jnp.float32)

    # Lane-dense layout: lane axis = H*T, weights broadcast as (1, D).
    pred2 = pred.reshape(B, D)
    targ2 = targ.reshape(B, D)
    w2 = weights.reshape(1, D).astype(jnp.float32)

    itemsize = pred2.dtype.itemsize
    # Batch tile: ~tile_bytes per input, multiple of 8 rows, capped at one
    # core's share of the batch so both TensorCores get work.
    bt = max(8, ((tile_bytes // max(D * itemsize, 1)) // 8) * 8)
    bt = min(bt, _round_up(-(-B // _NUM_CORES), 8))

    nb_total = -(-B // bt)                   # tiles that actually contain data
    ncores = min(_NUM_CORES, nb_total)       # don't spin up an empty core
    nb = -(-nb_total // ncores)              # tiles per core (grid axis 1)

    needs_mask = (ncores * nb * bt != B)     # ragged tail or redundant slots
    needs_clamp = (ncores * nb != nb_total)  # some (core, i) slots are redundant
    last_block = nb_total - 1

    if needs_clamp:
        # Clamp so redundant slots re-read the last real tile (their rows are
        # >= B, so the in-kernel mask zeroes their contribution).
        def data_map(c, i):
            return (jnp.minimum(c * nb + i, last_block), 0)
    else:
        def data_map(c, i):
            return (c * nb + i, 0)

    kernel = _make_kernel(B, bt, nb, needs_mask)

    partial = pl.pallas_call(
        kernel,
        out_shape=jax.ShapeDtypeStruct((ncores * 8, D), jnp.float32),
        grid_spec=pltpu.PrefetchScalarGridSpec(
            num_scalar_prefetch=0,
            grid=(ncores, nb),
            in_specs=[
                pl.BlockSpec((bt, D), data_map),
                pl.BlockSpec((bt, D), data_map),
                pl.BlockSpec((1, D), lambda c, i: (0, 0)),
            ],
            out_specs=pl.BlockSpec((8, D), lambda c, i: (c, 0)),
        ),
        compiler_params=pltpu.CompilerParams(
            dimension_semantics=("parallel", "arbitrary"),
            vmem_limit_bytes=32 * 1024 * 1024,
        ),
        cost_estimate=pl.CostEstimate(
            flops=4 * B * D,
            transcendentals=0,
            bytes_accessed=2 * B * D * itemsize + D * 4,
        ),
    )(pred2, targ2, w2)

    # One tiny cross-lane reduce outside the hot loop; divide by the *actual*
    # element count so masked/ragged rows never affect the mean.
    mean_loss = jnp.sum(partial) / jnp.float32(B * H * T)
    return mean_loss, {}


if __name__ == "__main__":
    key = jax.random.PRNGKey(0)
    k_pred, k_targ, k_pred2, k_targ2 = jax.random.split(key, 4)

    B, H, T = 2, 8, 32  # batch x horizon x transition_dim
    pred = jax.random.normal(k_pred, (B, H, T), dtype=jnp.float32)
    targ = jax.random.normal(k_targ, (B, H, T), dtype=jnp.float32)

    # Deterministic weight buffer (e.g. discounted per-timestep weights).
    discounts = 0.99 ** jnp.arange(H, dtype=jnp.float32)          # [H]
    weights = jnp.broadcast_to(discounts[:, None], (H, T)).astype(jnp.float32)

    # Case 1: tiny batch (exercises the ragged-tail mask path, 1 core).
    out, info = weighted_loss(pred, targ, weights)
    out = jax.block_until_ready(out)
    ref = jnp.mean(((pred - targ) ** 2) * weights[None, :, :])
    assert jnp.allclose(out, ref, rtol=1e-5, atol=1e-6), (out, ref)

    # Case 2: weights=None path (plain mean).
    out_none, _ = weighted_loss(pred, targ, None)
    out_none = jax.block_until_ready(out_none)
    ref_none = jnp.mean((pred - targ) ** 2)
    assert jnp.allclose(out_none, ref_none, rtol=1e-5, atol=1e-6), (out_none, ref_none)

    # Case 3: multi-tile / two-core / clamped-index_map path (small tile budget
    # forces several batch tiles with a ragged tail and a redundant grid slot).
    B2 = 20
    pred_b = jax.random.normal(k_pred2, (B2, H, T), dtype=jnp.float32)
    targ_b = jax.random.normal(k_targ2, (B2, H, T), dtype=jnp.float32)
    out_b, _ = weighted_loss(pred_b, targ_b, weights, tile_bytes=8 * H * T * 4)
    out_b = jax.block_until_ready(out_b)
    ref_b = jnp.mean(((pred_b - targ_b) ** 2) * weights[None, :, :])
    assert jnp.allclose(out_b, ref_b, rtol=1e-5, atol=1e-6), (out_b, ref_b)

    print("KERNEL_OK")
</pallas_src>

<mosaic_0001>
module attributes {stable_mosaic.version = 11 : i64} {
  func.func @kernel(%arg0: i32, %arg1: i32, %arg2: memref<8x256xf32, #tpu.memory_space<vmem>>, %arg3: memref<8x256xf32, #tpu.memory_space<vmem>>, %arg4: memref<1x256xf32, #tpu.memory_space<vmem>>, %arg5: memref<8x256xf32, #tpu.memory_space<vmem>>) attributes {dimension_semantics = [#tpu.dimension_semantics<parallel>, #tpu.dimension_semantics<arbitrary>], iteration_bounds = array<i64: 1, 1>, scalar_prefetch = 0 : i64, scratch_operands = 0 : i64, tpu.core_type = #tpu.core_type<tc>, window_params = [{transform_indices = @transform_0, window_bounds = array<i64: 8, 256>}, {transform_indices = @transform_1, window_bounds = array<i64: 8, 256>}, {pipeline_mode = #tpu.pipeline_mode<synchronous>, transform_indices = @transform_2, window_bounds = array<i64: 1, 256>}, {transform_indices = @transform_3, window_bounds = array<i64: 8, 256>}]} {
    %c0_i32 = arith.constant 0 : i32
    %0 = arith.cmpi eq, %arg1, %c0_i32 : i32
    %1 = arith.extui %0 : i1 to i32
    %c0_i32_0 = arith.constant 0 : i32
    %2 = arith.cmpi ne, %1, %c0_i32_0 : i32
    scf.if %2 {
      %cst_11 = arith.constant 0.000000e+00 : f32
      %25 = vector.broadcast %cst_11 : f32 to vector<8x256xf32>
      %c0_12 = arith.constant 0 : index
      %c0_13 = arith.constant 0 : index
      %26 = vector.load %arg5[%c0_12, %c0_13] : memref<8x256xf32, #tpu.memory_space<vmem>>, vector<8x256xf32>
      tpu.vector_store %arg5[%c0_12, %c0_13], %25 {strides = array<i32>} : memref<8x256xf32, #tpu.memory_space<vmem>>, vector<8x256xf32>,
    } else {
    }
    %c0 = arith.constant 0 : index
    %c0_1 = arith.constant 0 : index
    %3 = vector.load %arg2[%c0, %c0_1] : memref<8x256xf32, #tpu.memory_space<vmem>>, vector<8x256xf32>
    %c0_2 = arith.constant 0 : index
    %c0_3 = arith.constant 0 : index
    %4 = vector.load %arg3[%c0_2, %c0_3] : memref<8x256xf32, #tpu.memory_space<vmem>>, vector<8x256xf32>
    %5 = arith.subf %3, %4 : vector<8x256xf32>
    %6 = arith.mulf %5, %5 : vector<8x256xf32>
    %c0_4 = arith.constant 0 : index
    %c0_5 = arith.constant 0 : index
    %7 = vector.load %arg4[%c0_4, %c0_5] : memref<1x256xf32, #tpu.memory_space<vmem>>, vector<1x256xf32>
    %8 = vector.broadcast %7 : vector<1x256xf32> to vector<8x256xf32>
    %9 = arith.mulf %6, %8 : vector<8x256xf32>
    %c1_i32 = arith.constant 1 : i32
    %10 = arith.muli %arg0, %c1_i32 : i32
    %11 = arith.addi %10, %arg1 : i32
    %12 = tpu.iota {dimensions = array<i32: 0>} : vector<8x256xi32>
    %c8_i32 = arith.constant 8 : i32
    %13 = arith.muli %11, %c8_i32 : i32
    %14 = vector.broadcast %13 : i32 to vector<8x256xi32>
    %15 = arith.addi %12, %14 : vector<8x256xi32>
    %c2_i32 = arith.constant 2 : i32
    %16 = vector.broadcast %c2_i32 : i32 to vector<8x256xi32>
    %17 = arith.cmpi slt, %15, %16 : vector<8x256xi32>
    %cst = arith.constant 0.000000e+00 : f32
    %18 = vector.broadcast %cst : f32 to vector<8x256xf32>
    %19 = arith.select %17, %9, %18 : vector<8x256xi1>, vector<8x256xf32>
    %c0_6 = arith.constant 0 : index
    %c0_7 = arith.constant 0 : index
    %20 = vector.load %arg5[%c0_6, %c0_7] : memref<8x256xf32, #tpu.memory_space<vmem>>, vector<8x256xf32>
    %21 = vector.shape_cast %19 : vector<8x256xf32> to vector<1x8x256xf32>
    %cst_8 = arith.constant dense<0.000000e+00> : vector<8x256xf32>
    %22 = vector.multi_reduction <add>, %21, %cst_8 [0] : vector<1x8x256xf32> to vector<8x256xf32>
    %23 = arith.addf %20, %22 : vector<8x256xf32>
    %c0_9 = arith.constant 0 : index
    %c0_10 = arith.constant 0 : index
    %24 = vector.load %arg5[%c0_9, %c0_10] : memref<8x256xf32, #tpu.memory_space<vmem>>, vector<8x256xf32>
    tpu.vector_store %arg5[%c0_9, %c0_10], %23 {strides = array<i32>} : memref<8x256xf32, #tpu.memory_space<vmem>>, vector<8x256xf32>,
    return
  }
  func.func @transform_0(%arg0: i32, %arg1: i32) -> (i32, i32) {
    %c1_i32 = arith.constant 1 : i32
    %0 = arith.muli %arg0, %c1_i32 : i32
    %1 = arith.addi %0, %arg1 : i32
    %c0_i32 = arith.constant 0 : i32
    %c0_i32_0 = arith.constant 0 : i32
    return %1, %c0_i32 : i32, i32
  }
  func.func @transform_1(%arg0: i32, %arg1: i32) -> (i32, i32) {
    %c1_i32 = arith.constant 1 : i32
    %0 = arith.muli %arg0, %c1_i32 : i32
    %1 = arith.addi %0, %arg1 : i32
    %c0_i32 = arith.constant 0 : i32
    %c0_i32_0 = arith.constant 0 : i32
    return %1, %c0_i32 : i32, i32
  }
  func.func @transform_2(%arg0: i32, %arg1: i32) -> (i32, i32) {
    %c0_i32 = arith.constant 0 : i32
    %c0_i32_0 = arith.constant 0 : i32
    %c0_i32_1 = arith.constant 0 : i32
    return %c0_i32, %c0_i32_0 : i32, i32
  }
  func.func @transform_3(%arg0: i32, %arg1: i32) -> (i32, i32) {
    %c0_i32 = arith.constant 0 : i32
    %c0_i32_0 = arith.constant 0 : i32
    return %arg0, %c0_i32 : i32, i32
  }
}

</mosaic_0001>

<llo_original>
// kernel: tpu_custom_call.1
$region0: #{tpu_custom_call.1}
  #allocation0 [shape = 'u32[]', space=smem, size = 0x4, offset = 0x4, fixed_abs, tag = 'smem constant byte address 0x4 - core index']
  #allocation1 [shape = 'u32[144,128]{1,0:T(1,128)}', space=vmem, size = 0x12000, scoped, tag = 'internal scratch']
  %s0 = inlined_call_operand.hbm [shape: f32[2,256], index: 0, kind: input, shape index: {}]
  %s1 = inlined_call_operand.hbm [shape: f32[2,256], index: 1, kind: input, shape index: {}]
  %s2 = inlined_call_operand.vmem [shape: f32[1,256], index: 2, kind: input, shape index: {}]
  %s3 = inlined_call_operand.hbm [shape: f32[8,256], index: 3, kind: output, shape index: {}]
  %s4 = sld [smem:[#allocation0]]
  $region34: #{tpu_custom_call.1} parent=0
    _
  %s6 = ssub.s32 1, %s4
  %s7 = scalar_select 0, %s6, %s4
  $region1: #{tpu_custom_call.1} parent=0
    #allocation2 [shape = 'u8[8192]{0}', space=vmem, size = 0x2000, scoped, tag = 'input window, operand 0, single buffered']
    #allocation3 [shape = 's32[1]{0}', space=sflag, size = 0x4, scoped, tag = 'scoped memory for tpu_custom_call.1']
    #allocation4 [shape = 's32[1]{0}', space=sflag, size = 0x4, scoped, tag = 'scoped memory for tpu_custom_call.1']
    #allocation5 [shape = 'u8[8192]{0}', space=vmem, size = 0x2000, scoped, tag = 'input window, operand 1, single buffered']
    #allocation6 [shape = 's32[1]{0}', space=sflag, size = 0x4, scoped, tag = 'scoped memory for tpu_custom_call.1']
    #allocation7 [shape = 'u8[8192]{0}', space=vmem, size = 0x2000, scoped, tag = 'output window, operand 0, single buffered']
    %8 = vsyncpa [#allocation3], 0
    %9 = vsyncpa [#allocation6], 0
    %10 = vsyncpa [#allocation4], 0
    // Predicated region
    $region2: #{tpu_custom_call.1} parent=1 // pred_check
      _
    $region3: #{tpu_custom_call.1} parent=1 // pred_check_branch
      %12 = sbr.rel (0) target = $region5
    $region4: #{tpu_custom_call.1} parent=1 // pred_region
      %s13 = sadd.s32 0, 0
      %s14 = smul.u32 4, %s13
      %s15 = ssub.s32 1, %s14
      %s16 = smul.u32 32, %s15
      %s17 = smul.u32 %s16, 2
      %s19 = ssub.s32 256, %s17
      %20 = vsyncadd [#allocation3], %s19
      %p21 = scmp.ne.s32.totalorder 0, %s17
      %s22 = smul.addr %s14, 2
      %s23 = smul.addr %s22, 32
      %s24 = scalar_lea.hbm %s0, %s23
      %s25 = smul.u32 4, %s15
      %s26 = sshll.u32 [#allocation2], 4
      %s27 = int_to_ptr.vmem [resolvable:$true] %s26
      %s28 = sshll.u32 %s25, 4
      %32 = dma.hbm_to_vmem [thread:$0]  (%p21), %s24, %s28, %s27, [#allocation3], 64, 64, 4
    $region5: #{tpu_custom_call.1} parent=1 // pred_fallthru
      _
    // Predicated region
    $region6: #{tpu_custom_call.1} parent=1 // pred_check
      _
    $region7: #{tpu_custom_call.1} parent=1 // pred_check_branch
      %34 = sbr.rel (0) target = $region9
    $region8: #{tpu_custom_call.1} parent=1 // pred_region
      %s35 = sadd.s32 0, 0
      %s36 = smul.u32 4, %s35
      %s37 = ssub.s32 1, %s36
      %s38 = smul.u32 32, %s37
      %s39 = smul.u32 %s38, 2
      %s41 = ssub.s32 256, %s39
      %42 = vsyncadd [#allocation6], %s41
      %p43 = scmp.ne.s32.totalorder 0, %s39
      %s44 = smul.addr %s36, 2
      %s45 = smul.addr %s44, 32
      %s46 = scalar_lea.hbm %s1, %s45
      %s47 = smul.u32 4, %s37
      %s48 = sshll.u32 [#allocation5], 4
      %s49 = int_to_ptr.vmem [resolvable:$true] %s48
      %s50 = sshll.u32 %s47, 4
      %54 = dma.hbm_to_vmem [thread:$0]  (%p43), %s46, %s50, %s49, [#allocation6], 64, 64, 4
    $region9: #{tpu_custom_call.1} parent=1 // pred_fallthru
      _
    // Predicated region
    $region10: #{tpu_custom_call.1} parent=1 // pred_check
      _
    $region11: #{tpu_custom_call.1} parent=1 // pred_check_branch
      %56 = sbr.rel (0) target = $region13
    $region12: #{tpu_custom_call.1} parent=1 // pred_region
      _
    $region13: #{tpu_custom_call.1} parent=1 // pred_fallthru
      _
    // Predicated region
    $region14: #{tpu_custom_call.1} parent=1 // pred_check
      _
    $region15: #{tpu_custom_call.1} parent=1 // pred_check_branch
      %58 = sbr.rel (0) target = $region17
    $region16: #{tpu_custom_call.1} parent=1 // pred_region
      %59 = dma.done [#allocation3], 256
    $region17: #{tpu_custom_call.1} parent=1 // pred_fallthru
      _
    // Predicated region
    $region18: #{tpu_custom_call.1} parent=1 // pred_check
      _
    $region19: #{tpu_custom_call.1} parent=1 // pred_check_branch
      %61 = sbr.rel (0) target = $region21
    $region20: #{tpu_custom_call.1} parent=1 // pred_region
      %62 = dma.done [#allocation6], 256
    $region21: #{tpu_custom_call.1} parent=1 // pred_fallthru
      _
    %s63 = sadd.s32 0, 0
    %s64 = smul.u32 4, %s63
    %s65 = ssub.s32 1, %s64
    %s66 = smul.u32 32, %s65
    %s67 = smul.u32 %s66, 2
    %s68 = sadd.s32 0, 0
    %s69 = smul.u32 4, %s68
    %s70 = ssub.s32 1, %s69
    %s71 = smul.u32 32, %s70
    %s72 = smul.u32 %s71, 2
    %p73 = scmp.eq.s32.totalorder 0, 0
    // Predicated region
    $region22: #{tpu_custom_call.1} parent=1 // pred_check
      %p74 = pneg %p73
    $region23: #{tpu_custom_call.1} parent=1 // pred_check_branch
      %76 = sbr.rel (%p74) target = $region25
    $region24: #{tpu_custom_call.1} parent=1 // pred_region
      %77 = vst [vmem:[#allocation7] sm:$0xff] 0.0
      %78 = vst [vmem:[#allocation7 + $0x8] sm:$0xff] 0.0
    $region25: #{tpu_custom_call.1} parent=1 // pred_fallthru
      _
    %v79 = vld [vmem:[#allocation2] sm:$0xf]
    %v80 = vld [vmem:[#allocation2 + $0x4] sm:$0xf]
    %v81 = vld [vmem:[#allocation2 + $0x8] sm:$0xf]
    %v82 = vld [vmem:[#allocation2 + $0xc] sm:$0xf]
    %v83 = vld [vmem:[#allocation5] sm:$0xf]
    %v84 = vld [vmem:[#allocation5 + $0x4] sm:$0xf]
    %v85 = vld [vmem:[#allocation5 + $0x8] sm:$0xf]
    %v86 = vld [vmem:[#allocation5 + $0xc] sm:$0xf]
    %v87 = vsub.f32 %v79, %v83
    %v88 = vsub.f32 %v80, %v84
    %v89 = vsub.f32 %v81, %v85
    %v90 = vsub.f32 %v82, %v86
    %v91 = vmul.f32 %v87, %v87
    %v92 = vmul.f32 %v88, %v88
    %v93 = vmul.f32 %v89, %v89
    %v94 = vmul.f32 %v90, %v90
    %v95 = vld [vmem:[%s2] sm:$0x3]
    %v97 = vlaneseq
    %v98 = vshrl.u32 %v97, 7
    %v99 = vsub.s32 0, %v98
    %v100 = vrot.slane %v95, %v99
    %v101 = vlaneseq
    %v102 = vshrl.u32 %v101, 7
    %v103 = vsub.s32 1, %v102
    %v104 = vrot.slane %v95, %v103
    %v105 = vcombine.low %v100, %v104
    %v106 = vcombine.high %v100, %v104
    %v108 = vunpack.c.l.s4 1983009808
    %v109 = vunpack.c.0.s8 %v108
    %v110 = vlaneseq
    %v111 = vshrl.u32 %v110, 7
    %v112 = vsub.s32 %v109, %v111
    %v113 = vrot.slane %v105, %v112
    %v115 = vunpack.c.l.s4 1983009808
    %v116 = vunpack.c.0.s8 %v115
    %v117 = vlaneseq
    %v118 = vshrl.u32 %v117, 7
    %v119 = vsub.s32 %v116, %v118
    %v120 = vrot.slane %v106, %v119
    %v121 = vcombine.high %v113, %v113
    %v122 = vcombine.high %v120, %v120
    %v127 = vmul.f32 %v91, %v113
    %v128 = vmul.f32 %v92, %v121
    %v129 = vmul.f32 %v93, %v120
    %v130 = vmul.f32 %v94, %v122
    %s131 = sadd.s32 0, 0
    %v132 = vlaneseq
    %v133 = vshrl.u32 %v132, 7
    %s134 = smul.u32 %s131, 8
    %v135 = vstv %s134
    %v136 = vadd.s32 %v133, %v135
    %vm137 = vcmp.lt.s32.totalorder %v136, 2
    %v142 = vcombine.low %v127, %v128
    %v143 = vcombine.low %v129, %v130
    %v145 = vunpack.c.l.s4 1983009808
    %v146 = vunpack.c.0.s8 %v145
    %v147 = vlaneseq
    %v148 = vshrl.u32 %v147, 7
    %v149 = vsub.s32 %v146, %v148
    %v150 = vrot.slane %v142, %v149
    %v152 = vunpack.c.l.s4 1983009808
    %v153 = vunpack.c.0.s8 %v152
    %v154 = vlaneseq
    %v155 = vshrl.u32 %v154, 7
    %v156 = vsub.s32 %v153, %v155
    %v157 = vrot.slane %v143, %v156
    %v158 = vcombine.low %v150, %v157
    %v159 = vcombine.high %v150, %v157
    %v162 = vsel %vm137, %v158, 0.0
    %v163 = vsel %vm137, %v159, 0.0
    %v164 = vld [vmem:[#allocation7] sm:$0xff]
    %v165 = vld [vmem:[#allocation7 + $0x8] sm:$0xff]
    %v166 = vadd.f32 %v162, 0.0
    %v167 = vadd.f32 %v163, 0.0
    %v168 = vadd.f32 %v164, %v166
    %v169 = vadd.f32 %v165, %v167
    %170 = vst [vmem:[#allocation7] sm:$0xff] %v168
    %171 = vst [vmem:[#allocation7 + $0x8] sm:$0xff] %v169
    // Predicated region
    $region26: #{tpu_custom_call.1} parent=1 // pred_check
      _
    $region27: #{tpu_custom_call.1} parent=1 // pred_check_branch
      %173 = sbr.rel (0) target = $region29
    $region28: #{tpu_custom_call.1} parent=1 // pred_region
      %s175 = ssub.s32 256, 256
      %176 = vsyncadd [#allocation4], %s175
      %s178 = sshll.u32 [#allocation7], 4
      %s179 = int_to_ptr.vmem [resolvable:$true] %s178
      %181 = dma.vmem_to_hbm [thread:$0]  %s179, 256, %s3, [#allocation4]
    $region29: #{tpu_custom_call.1} parent=1 // pred_fallthru
      _
    // Predicated region
    $region30: #{tpu_custom_call.1} parent=1 // pred_check
      _
    $region31: #{tpu_custom_call.1} parent=1 // pred_check_branch
      %183 = sbr.rel (0) target = $region33
    $region32: #{tpu_custom_call.1} parent=1 // pred_region
      %184 = dma.done [#allocation4], 256
    $region33: #{tpu_custom_call.1} parent=1 // pred_fallthru
      _
    %185 = vsyncpa [#allocation3], 1
    %186 = vsyncpa [#allocation6], 1
    %187 = vsyncpa [#allocation4], 1

</llo_original>
